<compile_context>
chip_gen: v7x
topology: tpu7x:2x2x1
jax: 0.10.0
libtpu: 0.0.40
codegen_flags: <defaults>
</compile_context>

<pallas_src>
import functools

import jax
import jax.numpy as jnp
from jax.experimental import pallas as pl
from jax.experimental.pallas import tpu as pltpu

KSIZE = 4
STRIDE = 2
PAD = 1
BN_EPS = 1e-5
LANE = 128
SUBLANE_BF16 = 16          # bf16 packs 16 rows per sublane tile
MAX_TILE_M1 = 512          # matmul pass tile cap (rows)
MAX_TILE_M2 = 2048         # elementwise pass tile cap (rows)
VMEM_BUDGET = 12 * 1024 * 1024
VMEM_LIMIT = 32 * 1024 * 1024


def _round_up(x, m):
    return (x + m - 1) // m * m


# ---------------------------------------------------------------------------
# Pass 1: conv-as-matmul (bf16 in, f32 MXU accumulate) + per-tile, per-sublane
# partial sums / sums-of-squares for the BatchNorm batch statistics.
# No cross-iteration state -> grid axis is fully parallel (v7x megacore).
# ---------------------------------------------------------------------------
def conv_stats_kernel(p_ref, w_ref, y_ref, sum_ref, sq_ref):
    y = jnp.dot(p_ref[...], w_ref[...], preferred_element_type=jnp.float32)
    # bf16 intermediate halves the write + later re-read of [M, Cout_pad].
    y_ref[...] = y.astype(y_ref.dtype)
    # Per-sublane partials: reshape splits the sublane-major dim, so the sum
    # over axis 0 is plain VPU vreg adds (no per-step XLU cross-sublane reduce).
    yr = y.reshape(-1, 8, y.shape[-1])
    sum_ref[...] = jnp.sum(yr, axis=0)
    sq_ref[...] = jnp.sum(yr * yr, axis=0)


# ---------------------------------------------------------------------------
# Pass 2: folded BatchNorm (y*scale + bias) + activation, streamed over M with
# large tiles; output aliases the bf16 intermediate buffer.
# ---------------------------------------------------------------------------
def bn_act_kernel(y_ref, scale_ref, bias_ref, o_ref, *, act, negative_slope):
    y = y_ref[...].astype(jnp.float32)
    out = y * scale_ref[...] + bias_ref[...]
    if act == "relu":
        out = jnp.maximum(out, 0.0)
    else:  # LeakyReLU(negative_slope)
        out = jnp.where(out >= 0.0, out, negative_slope * out)
    o_ref[...] = out.astype(o_ref.dtype)


def _im2col_reflect(x_nchw, dtype):
    """Reflect-pad (pad=1) and extract 4x4 stride-2 patches.

    Returns patches [M, K] (K ordered as kh, kw, cin) in `dtype`, plus (N, Ho, Wo).
    """
    n, cin, h, w = x_nchw.shape
    ho = (h + 2 * PAD - KSIZE) // STRIDE + 1
    wo = (w + 2 * PAD - KSIZE) // STRIDE + 1

    x_nhwc = jnp.transpose(x_nchw, (0, 2, 3, 1)).astype(dtype)
    x_pad = jnp.pad(x_nhwc, ((0, 0), (PAD, PAD), (PAD, PAD), (0, 0)), mode="reflect")

    cols = []
    for kh in range(KSIZE):
        for kw in range(KSIZE):
            cols.append(x_pad[:, kh:kh + STRIDE * ho:STRIDE, kw:kw + STRIDE * wo:STRIDE, :])
    patches = jnp.stack(cols, axis=-2).reshape(n * ho * wo, KSIZE * KSIZE * cin)
    return patches, (n, ho, wo)


def block_forward(x_nchw, conv_w, gamma, beta, *, act="relu"):
    """Forward pass of Block(down=True, act=act, use_dropout=False).

    x_nchw : [N, Cin, H, W]   conv_w : [Cout, Cin, 4, 4]   gamma, beta : [Cout]
    Returns [N, Cout, H//2, W//2] float32.
    """
    cout, cin = conv_w.shape[0], conv_w.shape[1]

    # TODO(synk): the remaining HBM lever is forming the patches in-kernel
    # (padded NHWC rows kept in HBM via memory_space=pl.ANY, per-tile DMA +
    # static strided slices); host im2col is kept here for robustness but is
    # emitted in bf16 with no K padding to minimize the stream.
    patches, (n, ho, wo) = _im2col_reflect(x_nchw, jnp.bfloat16)
    m, k = patches.shape

    # Reorder conv weight to match patch ordering (kh, kw, cin) -> [K, Cout], bf16.
    w2d = jnp.transpose(conv_w, (2, 3, 1, 0)).reshape(k, cout).astype(jnp.bfloat16)

    # Cout padded to 128 lanes for lane-dense (unmasked) stores; K left at its
    # real size (full-dim blocks are legal and avoid doubling the patch reads).
    cout_pad = _round_up(cout, LANE)

    def pass1_vmem(tm):
        return (2 * tm * k * 2            # patches tile, double-buffered bf16
                + 2 * k * cout_pad * 2    # resident weight (budget 2 buffers)
                + 2 * tm * cout_pad * 2   # y tile, double-buffered bf16
                + 2 * 2 * 8 * cout_pad * 4)  # stats partials

    def pass2_vmem(tm):
        return 4 * tm * cout_pad * 2 + 4 * cout_pad * 4

    # --- pass 1 tiling: equalized tiles, rounded to 16 rows (bf16 sublanes) ---
    # TODO(synk): for very large K (Cin >= 512) a K grid axis with an f32 VMEM
    # accumulator would keep the resident weight block small; single-shot K is
    # fine within the 32 MiB limit for typical Block sizes.
    tile_cap = MAX_TILE_M1
    while tile_cap > 64 and pass1_vmem(tile_cap) > VMEM_BUDGET:
        tile_cap //= 2
    n_tiles = pl.cdiv(m, tile_cap)
    tile_m = _round_up(pl.cdiv(m, n_tiles), SUBLANE_BF16)
    m_pad = n_tiles * tile_m

    if m_pad != m:
        patches = jnp.pad(patches, ((0, m_pad - m), (0, 0)))
    if cout_pad != cout:
        w2d = jnp.pad(w2d, ((0, 0), (0, cout_pad - cout)))

    cost1 = pl.CostEstimate(
        flops=2 * m_pad * k * cout_pad,
        transcendentals=0,
        bytes_accessed=(m_pad * k * 2 + k * cout_pad * 2
                        + m_pad * cout_pad * 2 + 2 * n_tiles * 8 * cout_pad * 4),
    )

    y_flat, sum_parts, sq_parts = pl.pallas_call(
        conv_stats_kernel,
        grid=(n_tiles,),
        in_specs=[
            pl.BlockSpec((tile_m, k), lambda i: (i, 0)),      # patches tile (bf16)
            pl.BlockSpec((k, cout_pad), lambda i: (0, 0)),    # weight, VMEM-resident
        ],
        out_specs=(
            pl.BlockSpec((tile_m, cout_pad), lambda i: (i, 0)),  # conv output tile (bf16)
            pl.BlockSpec((8, cout_pad), lambda i: (i, 0)),       # per-tile sum partials
            pl.BlockSpec((8, cout_pad), lambda i: (i, 0)),       # per-tile sum-sq partials
        ),
        out_shape=(
            jax.ShapeDtypeStruct((m_pad, cout_pad), jnp.bfloat16),
            jax.ShapeDtypeStruct((n_tiles * 8, cout_pad), jnp.float32),
            jax.ShapeDtypeStruct((n_tiles * 8, cout_pad), jnp.float32),
        ),
        compiler_params=pltpu.CompilerParams(
            dimension_semantics=("parallel",),
            vmem_limit_bytes=VMEM_LIMIT,
        ),
        cost_estimate=cost1,
    )(patches, w2d)

    # --- tiny per-channel BN folding in plain JAX (padded M rows are zero and
    # contribute 0 to both sums, so dividing by the real M is exact) ---------
    inv_m = 1.0 / float(m)
    ch_sum = jnp.sum(sum_parts, axis=0)
    ch_sq = jnp.sum(sq_parts, axis=0)
    mean = ch_sum * inv_m
    # TODO(synk): E[y^2] - mean^2 can cancel for strongly non-zero-mean conv
    # outputs; a shifted two-pass variance would be safer for bit-level parity.
    var = jnp.maximum(ch_sq * inv_m - mean * mean, 0.0)  # biased var, like torch BN fwd
    inv_std = jax.lax.rsqrt(var + BN_EPS)
    gamma_p = jnp.pad(gamma.astype(jnp.float32), (0, cout_pad - cout))
    beta_p = jnp.pad(beta.astype(jnp.float32), (0, cout_pad - cout))
    scale_1d = gamma_p * inv_std
    bias_1d = beta_p - mean * scale_1d
    scale = scale_1d.reshape(1, cout_pad)
    bias = bias_1d.reshape(1, cout_pad)

    # --- pass 2 tiling: group pass-1 tiles into larger streaming tiles -------
    g = 1
    for cand in range(n_tiles, 0, -1):
        if (n_tiles % cand == 0 and tile_m * cand <= MAX_TILE_M2
                and pass2_vmem(tile_m * cand) <= VMEM_BUDGET):
            g = cand
            break
    tile_m2 = tile_m * g
    n_tiles2 = n_tiles // g

    kernel2 = functools.partial(bn_act_kernel, act=act, negative_slope=0.2)
    cost2 = pl.CostEstimate(
        flops=2 * m_pad * cout_pad,
        transcendentals=0,
        bytes_accessed=2 * m_pad * cout_pad * 2 + 2 * cout_pad * 4,
    )
    out_flat = pl.pallas_call(
        kernel2,
        grid=(n_tiles2,),
        in_specs=[
            pl.BlockSpec((tile_m2, cout_pad), lambda i: (i, 0)),  # conv output tile (bf16)
            pl.BlockSpec((1, cout_pad), lambda i: (0, 0)),        # folded BN scale
            pl.BlockSpec((1, cout_pad), lambda i: (0, 0)),        # folded BN bias
        ],
        out_specs=pl.BlockSpec((tile_m2, cout_pad), lambda i: (i, 0)),
        out_shape=jax.ShapeDtypeStruct((m_pad, cout_pad), jnp.bfloat16),
        input_output_aliases={0: 0},   # write back into the y_flat buffer
        compiler_params=pltpu.CompilerParams(
            dimension_semantics=("parallel",),
            vmem_limit_bytes=VMEM_LIMIT,
        ),
        cost_estimate=cost2,
    )(y_flat, scale, bias)

    # TODO(synk): nn.Dropout(0.5) with use_dropout=True would need in-kernel RNG
    # (pltpu.prng_seed / prng_random_bits); with use_dropout=False it is identity.

    out = out_flat[:m, :cout].reshape(n, ho, wo, cout)
    # NHWC -> NCHW; XLA fuses the f32 upcast into the transpose.
    return jnp.transpose(out, (0, 3, 1, 2)).astype(jnp.float32)


def _reference(x, w, gamma, beta):
    """Pure-JAX f32 reference of Block(down=True, relu, no dropout)."""
    xp = jnp.pad(x, ((0, 0), (0, 0), (PAD, PAD), (PAD, PAD)), mode="reflect")
    y = jax.lax.conv_general_dilated(
        xp, w, window_strides=(STRIDE, STRIDE), padding="VALID",
        dimension_numbers=("NCHW", "OIHW", "NCHW"))
    mean = jnp.mean(y, axis=(0, 2, 3), keepdims=True)
    var = jnp.mean((y - mean) ** 2, axis=(0, 2, 3), keepdims=True)
    y_hat = (y - mean) * jax.lax.rsqrt(var + BN_EPS)
    out = y_hat * gamma.reshape(1, -1, 1, 1) + beta.reshape(1, -1, 1, 1)
    return jnp.maximum(out, 0.0)


if __name__ == "__main__":
    # Small deterministic example: Block(in_channels=4, out_channels=8, down=True).
    N, CIN, H, W = 2, 4, 16, 16
    COUT = 8

    key = jax.random.PRNGKey(0)
    kx, kw, kg, kb = jax.random.split(key, 4)

    x = jax.random.normal(kx, (N, CIN, H, W), dtype=jnp.float32)
    conv_w = 0.1 * jax.random.normal(kw, (COUT, CIN, KSIZE, KSIZE), dtype=jnp.float32)
    gamma = 1.0 + 0.05 * jax.random.normal(kg, (COUT,), dtype=jnp.float32)
    beta = 0.05 * jax.random.normal(kb, (COUT,), dtype=jnp.float32)

    fwd = jax.jit(lambda a, b, c, d: block_forward(a, b, c, d, act="relu"))
    y = fwd(x, conv_w, gamma, beta)
    jax.block_until_ready(y)
    assert y.shape == (N, COUT, H // 2, W // 2), y.shape

    # Loose correctness check vs. an f32 reference (bf16 MXU inputs and a bf16
    # intermediate => small numerical delta).
    ref = _reference(x, conv_w, gamma, beta)
    err = float(jnp.max(jnp.abs(y - ref)))
    assert err < 0.15, f"max abs err {err}"

    print("KERNEL_OK")
</pallas_src>

<mosaic_0001>
module attributes {stable_mosaic.version = 11 : i64} {
  func.func @conv_stats_kernel(%arg0: i32, %arg1: memref<128x64xbf16, #tpu.memory_space<vmem>>, %arg2: memref<64x128xbf16, #tpu.memory_space<vmem>>, %arg3: memref<128x128xbf16, #tpu.memory_space<vmem>>, %arg4: memref<8x128xf32, #tpu.memory_space<vmem>>, %arg5: memref<8x128xf32, #tpu.memory_space<vmem>>) attributes {dimension_semantics = [#tpu.dimension_semantics<parallel>], iteration_bounds = array<i64: 1>, scalar_prefetch = 0 : i64, scratch_operands = 0 : i64, tpu.core_type = #tpu.core_type<tc>, window_params = [{transform_indices = @transform_0, window_bounds = array<i64: 128, 64>}, {pipeline_mode = #tpu.pipeline_mode<synchronous>, transform_indices = @transform_1, window_bounds = array<i64: 64, 128>}, {transform_indices = @transform_2, window_bounds = array<i64: 128, 128>}, {transform_indices = @transform_3, window_bounds = array<i64: 8, 128>}, {transform_indices = @transform_4, window_bounds = array<i64: 8, 128>}]} {
    %c0 = arith.constant 0 : index
    %c0_0 = arith.constant 0 : index
    %0 = vector.load %arg1[%c0, %c0_0] : memref<128x64xbf16, #tpu.memory_space<vmem>>, vector<128x64xbf16>
    %c0_1 = arith.constant 0 : index
    %c0_2 = arith.constant 0 : index
    %1 = vector.load %arg2[%c0_1, %c0_2] : memref<64x128xbf16, #tpu.memory_space<vmem>>, vector<64x128xbf16>
    %cst = arith.constant dense<0.000000e+00> : vector<128x128xf32>
    %2 = tpu.matmul %0, %1, %cst {dimension_numbers = #tpu.dot_dimension_numbers<[1], [0], [0], [1], [0, 0, 1, 1], [], []>} : vector<128x64xbf16>, vector<64x128xbf16>, vector<128x128xf32> -> vector<128x128xf32>
    %3 = arith.truncf %2 : vector<128x128xf32> to vector<128x128xbf16>
    %c0_3 = arith.constant 0 : index
    %c0_4 = arith.constant 0 : index
    %4 = vector.load %arg3[%c0_3, %c0_4] : memref<128x128xbf16, #tpu.memory_space<vmem>>, vector<128x128xbf16>
    tpu.vector_store %arg3[%c0_3, %c0_4], %3 {strides = array<i32>} : memref<128x128xbf16, #tpu.memory_space<vmem>>, vector<128x128xbf16>,
    %5 = vector.shape_cast %2 : vector<128x128xf32> to vector<16x8x128xf32>
    %cst_5 = arith.constant dense<0.000000e+00> : vector<8x128xf32>
    %6 = vector.multi_reduction <add>, %5, %cst_5 [0] : vector<16x8x128xf32> to vector<8x128xf32>
    %c0_6 = arith.constant 0 : index
    %c0_7 = arith.constant 0 : index
    %7 = vector.load %arg4[%c0_6, %c0_7] : memref<8x128xf32, #tpu.memory_space<vmem>>, vector<8x128xf32>
    tpu.vector_store %arg4[%c0_6, %c0_7], %6 {strides = array<i32>} : memref<8x128xf32, #tpu.memory_space<vmem>>, vector<8x128xf32>,
    %8 = arith.mulf %5, %5 : vector<16x8x128xf32>
    %cst_8 = arith.constant dense<0.000000e+00> : vector<8x128xf32>
    %9 = vector.multi_reduction <add>, %8, %cst_8 [0] : vector<16x8x128xf32> to vector<8x128xf32>
    %c0_9 = arith.constant 0 : index
    %c0_10 = arith.constant 0 : index
    %10 = vector.load %arg5[%c0_9, %c0_10] : memref<8x128xf32, #tpu.memory_space<vmem>>, vector<8x128xf32>
    tpu.vector_store %arg5[%c0_9, %c0_10], %9 {strides = array<i32>} : memref<8x128xf32, #tpu.memory_space<vmem>>, vector<8x128xf32>,
    return
  }
  func.func @transform_0(%arg0: i32) -> (i32, i32) {
    %c0_i32 = arith.constant 0 : i32
    %c0_i32_0 = arith.constant 0 : i32
    return %arg0, %c0_i32 : i32, i32
  }
  func.func @transform_1(%arg0: i32) -> (i32, i32) {
    %c0_i32 = arith.constant 0 : i32
    %c0_i32_0 = arith.constant 0 : i32
    %c0_i32_1 = arith.constant 0 : i32
    return %c0_i32, %c0_i32_0 : i32, i32
  }
  func.func @transform_2(%arg0: i32) -> (i32, i32) {
    %c0_i32 = arith.constant 0 : i32
    %c0_i32_0 = arith.constant 0 : i32
    return %arg0, %c0_i32 : i32, i32
  }
  func.func @transform_3(%arg0: i32) -> (i32, i32) {
    %c0_i32 = arith.constant 0 : i32
    %c0_i32_0 = arith.constant 0 : i32
    return %arg0, %c0_i32 : i32, i32
  }
  func.func @transform_4(%arg0: i32) -> (i32, i32) {
    %c0_i32 = arith.constant 0 : i32
    %c0_i32_0 = arith.constant 0 : i32
    return %arg0, %c0_i32 : i32, i32
  }
}

module attributes {stable_mosaic.version = 11 : i64} {
  func.func @bn_act_kernel(%arg0: i32, %arg1: memref<128x128xbf16, #tpu.memory_space<vmem>>, %arg2: memref<1x128xf32, #tpu.memory_space<vmem>>, %arg3: memref<1x128xf32, #tpu.memory_space<vmem>>, %arg4: memref<128x128xbf16, #tpu.memory_space<vmem>>) attributes {dimension_semantics = [#tpu.dimension_semantics<parallel>], iteration_bounds = array<i64: 1>, scalar_prefetch = 0 : i64, scratch_operands = 0 : i64, tpu.core_type = #tpu.core_type<tc>, window_params = [{transform_indices = @transform_0, window_bounds = array<i64: 128, 128>}, {pipeline_mode = #tpu.pipeline_mode<synchronous>, transform_indices = @transform_1, window_bounds = array<i64: 1, 128>}, {pipeline_mode = #tpu.pipeline_mode<synchronous>, transform_indices = @transform_2, window_bounds = array<i64: 1, 128>}, {transform_indices = @transform_3, window_bounds = array<i64: 128, 128>}]} {
    %c0 = arith.constant 0 : index
    %c0_0 = arith.constant 0 : index
    %0 = vector.load %arg1[%c0, %c0_0] : memref<128x128xbf16, #tpu.memory_space<vmem>>, vector<128x128xbf16>
    %1 = arith.extf %0 : vector<128x128xbf16> to vector<128x128xf32>
    %c0_1 = arith.constant 0 : index
    %c0_2 = arith.constant 0 : index
    %2 = vector.load %arg2[%c0_1, %c0_2] : memref<1x128xf32, #tpu.memory_space<vmem>>, vector<1x128xf32>
    %3 = vector.broadcast %2 : vector<1x128xf32> to vector<128x128xf32>
    %4 = arith.mulf %1, %3 : vector<128x128xf32>
    %c0_3 = arith.constant 0 : index
    %c0_4 = arith.constant 0 : index
    %5 = vector.load %arg3[%c0_3, %c0_4] : memref<1x128xf32, #tpu.memory_space<vmem>>, vector<1x128xf32>
    %6 = vector.broadcast %5 : vector<1x128xf32> to vector<128x128xf32>
    %7 = arith.addf %4, %6 : vector<128x128xf32>
    %cst = arith.constant 0.000000e+00 : f32
    %8 = vector.broadcast %cst : f32 to vector<128x128xf32>
    %9 = arith.maximumf %7, %8 : vector<128x128xf32>
    %10 = arith.truncf %9 : vector<128x128xf32> to vector<128x128xbf16>
    %c0_5 = arith.constant 0 : index
    %c0_6 = arith.constant 0 : index
    %11 = vector.load %arg4[%c0_5, %c0_6] : memref<128x128xbf16, #tpu.memory_space<vmem>>, vector<128x128xbf16>
    tpu.vector_store %arg4[%c0_5, %c0_6], %10 {strides = array<i32>} : memref<128x128xbf16, #tpu.memory_space<vmem>>, vector<128x128xbf16>,
    return
  }
  func.func @transform_0(%arg0: i32) -> (i32, i32) {
    %c0_i32 = arith.constant 0 : i32
    %c0_i32_0 = arith.constant 0 : i32
    return %arg0, %c0_i32 : i32, i32
  }
  func.func @transform_1(%arg0: i32) -> (i32, i32) {
    %c0_i32 = arith.constant 0 : i32
    %c0_i32_0 = arith.constant 0 : i32
    %c0_i32_1 = arith.constant 0 : i32
    return %c0_i32, %c0_i32_0 : i32, i32
  }
  func.func @transform_2(%arg0: i32) -> (i32, i32) {
    %c0_i32 = arith.constant 0 : i32
    %c0_i32_0 = arith.constant 0 : i32
    %c0_i32_1 = arith.constant 0 : i32
    return %c0_i32, %c0_i32_0 : i32, i32
  }
  func.func @transform_3(%arg0: i32) -> (i32, i32) {
    %c0_i32 = arith.constant 0 : i32
    %c0_i32_0 = arith.constant 0 : i32
    return %arg0, %c0_i32 : i32, i32
  }
}

</mosaic_0001>

<llo_original>
// kernel: _lambda_.3
$region0: #{_lambda_.3}
  #allocation0 [shape = 'u32[]', space=smem, size = 0x4, offset = 0x4, fixed_abs, tag = 'smem constant byte address 0x4 - core index']
  #allocation1 [shape = 'u32[144,128]{1,0:T(1,128)}', space=vmem, size = 0x12000, scoped, tag = 'internal scratch']
  %s0 = inlined_call_operand.vmem [shape: bf16[128,128], index: 0, kind: input, shape index: {}, may-alias: {0,3}]
  %s1 = inlined_call_operand.vmem [shape: f32[1,128], index: 1, kind: input, shape index: {}]
  %s2 = inlined_call_operand.vmem [shape: f32[1,128], index: 2, kind: input, shape index: {}]
  %s3 = inlined_call_operand.vmem [shape: bf16[128,128], index: 3, kind: output, shape index: {}, may-alias: {0,3}]
  %s4 = sld [smem:[#allocation0]]
  $region22: #{_lambda_.3} parent=0
    _
  %s6 = ssub.s32 1, %s4
  %s7 = scalar_select 0, %s6, %s4
  // Predicated region
  $region2: #{_lambda_.3} parent=0 // pred_check
    _
  $region3: #{_lambda_.3} parent=0 // pred_check_branch
    %9 = sbr.rel (0) target = $region5
  $region4: #{_lambda_.3} parent=0 // pred_region
    _
  $region5: #{_lambda_.3} parent=0 // pred_fallthru
    _
  // Predicated region
  $region6: #{_lambda_.3} parent=0 // pred_check
    _
  $region7: #{_lambda_.3} parent=0 // pred_check_branch
    %11 = sbr.rel (0) target = $region9
  $region8: #{_lambda_.3} parent=0 // pred_region
    _
  $region9: #{_lambda_.3} parent=0 // pred_fallthru
    _
  // Predicated region
  $region10: #{_lambda_.3} parent=0 // pred_check
    _
  $region11: #{_lambda_.3} parent=0 // pred_check_branch
    %13 = sbr.rel (0) target = $region13
  $region12: #{_lambda_.3} parent=0 // pred_region
    _
  $region13: #{_lambda_.3} parent=0 // pred_fallthru
    _
  %v14 = vld [vmem:[%s0] sm:$0xf]
  %v15 = vld [vmem:[%s0 + $0x4] sm:$0xf]
  %v16 = vld [vmem:[%s0 + $0x8] sm:$0xf]
  %v17 = vld [vmem:[%s0 + $0xc] sm:$0xf]
  %v18 = vld [vmem:[%s0 + $0x10] sm:$0xf]
  %v19 = vld [vmem:[%s0 + $0x14] sm:$0xf]
  %v20 = vld [vmem:[%s0 + $0x18] sm:$0xf]
  %v21 = vld [vmem:[%s0 + $0x1c] sm:$0xf]
  %v22 = vld [vmem:[%s0 + $0x20] sm:$0xf]
  %v23 = vld [vmem:[%s0 + $0x24] sm:$0xf]
  %v24 = vld [vmem:[%s0 + $0x28] sm:$0xf]
  %v25 = vld [vmem:[%s0 + $0x2c] sm:$0xf]
  %v26 = vld [vmem:[%s0 + $0x30] sm:$0xf]
  %v27 = vld [vmem:[%s0 + $0x34] sm:$0xf]
  %v28 = vld [vmem:[%s0 + $0x38] sm:$0xf]
  %v29 = vld [vmem:[%s0 + $0x3c] sm:$0xf]
  %v30 = vunpack.c.l.bf16 %v14
  %v31 = vunpack.c.l.bf16 %v15
  %v32 = vunpack.c.l.bf16 %v16
  %v33 = vunpack.c.l.bf16 %v17
  %v34 = vunpack.c.l.bf16 %v18
  %v35 = vunpack.c.l.bf16 %v19
  %v36 = vunpack.c.l.bf16 %v20
  %v37 = vunpack.c.l.bf16 %v21
  %v38 = vunpack.c.l.bf16 %v22
  %v39 = vunpack.c.l.bf16 %v23
  %v40 = vunpack.c.l.bf16 %v24
  %v41 = vunpack.c.l.bf16 %v25
  %v42 = vunpack.c.l.bf16 %v26
  %v43 = vunpack.c.l.bf16 %v27
  %v44 = vunpack.c.l.bf16 %v28
  %v45 = vunpack.c.l.bf16 %v29
  %v46 = vld [vmem:[%s1] sm:$0x1]
  %v48 = vlaneseq
  %v49 = vshrl.u32 %v48, 7
  %v50 = vsub.s32 0, %v49
  %v51 = vrot.slane %v46, %v50
  %v53 = vmul.f32 %v30, %v51
  %v54 = vmul.f32 %v31, %v51
  %v55 = vmul.f32 %v32, %v51
  %v56 = vmul.f32 %v33, %v51
  %v57 = vmul.f32 %v34, %v51
  %v58 = vmul.f32 %v35, %v51
  %v59 = vmul.f32 %v36, %v51
  %v60 = vmul.f32 %v37, %v51
  %v61 = vmul.f32 %v38, %v51
  %v62 = vmul.f32 %v39, %v51
  %v63 = vmul.f32 %v40, %v51
  %v64 = vmul.f32 %v41, %v51
  %v65 = vmul.f32 %v42, %v51
  %v66 = vmul.f32 %v43, %v51
  %v67 = vmul.f32 %v44, %v51
  %v68 = vmul.f32 %v45, %v51
  %v69 = vld [vmem:[%s2] sm:$0x1]
  %v71 = vlaneseq
  %v72 = vshrl.u32 %v71, 7
  %v73 = vsub.s32 0, %v72
  %v74 = vrot.slane %v69, %v73
  %v76 = vadd.f32 %v53, %v74
  %v77 = vadd.f32 %v54, %v74
  %v78 = vadd.f32 %v55, %v74
  %v79 = vadd.f32 %v56, %v74
  %v80 = vadd.f32 %v57, %v74
  %v81 = vadd.f32 %v58, %v74
  %v82 = vadd.f32 %v59, %v74
  %v83 = vadd.f32 %v60, %v74
  %v84 = vadd.f32 %v61, %v74
  %v85 = vadd.f32 %v62, %v74
  %v86 = vadd.f32 %v63, %v74
  %v87 = vadd.f32 %v64, %v74
  %v88 = vadd.f32 %v65, %v74
  %v89 = vadd.f32 %v66, %v74
  %v90 = vadd.f32 %v67, %v74
  %v91 = vadd.f32 %v68, %v74
  %v92 = vmax.f32 %v76, 0.0
  %v93 = vmax.f32 %v77, 0.0
  %v94 = vmax.f32 %v78, 0.0
  %v95 = vmax.f32 %v79, 0.0
  %v96 = vmax.f32 %v80, 0.0
  %v97 = vmax.f32 %v81, 0.0
  %v98 = vmax.f32 %v82, 0.0
  %v99 = vmax.f32 %v83, 0.0
  %v100 = vmax.f32 %v84, 0.0
  %v101 = vmax.f32 %v85, 0.0
  %v102 = vmax.f32 %v86, 0.0
  %v103 = vmax.f32 %v87, 0.0
  %v104 = vmax.f32 %v88, 0.0
  %v105 = vmax.f32 %v89, 0.0
  %v106 = vmax.f32 %v90, 0.0
  %v107 = vmax.f32 %v91, 0.0
  %v108 = vpack.c.bf16 %v93, %v92
  %v109 = vpack.c.bf16 %v95, %v94
  %v110 = vpack.c.bf16 %v97, %v96
  %v111 = vpack.c.bf16 %v99, %v98
  %v112 = vpack.c.bf16 %v101, %v100
  %v113 = vpack.c.bf16 %v103, %v102
  %v114 = vpack.c.bf16 %v105, %v104
  %v115 = vpack.c.bf16 %v107, %v106
  %v124 = vunpack.c.l.b16 %v108
  %v125 = vunpack.c.h.b16 %v108
  %v126 = vunpack.c.l.b16 %v109
  %v127 = vunpack.c.h.b16 %v109
  %v128 = vunpack.c.l.b16 %v110
  %v129 = vunpack.c.h.b16 %v110
  %v130 = vunpack.c.l.b16 %v111
  %v131 = vunpack.c.h.b16 %v111
  %v132 = vunpack.c.l.b16 %v112
  %v133 = vunpack.c.h.b16 %v112
  %v134 = vunpack.c.l.b16 %v113
  %v135 = vunpack.c.h.b16 %v113
  %v136 = vunpack.c.l.b16 %v114
  %v137 = vunpack.c.h.b16 %v114
  %v138 = vunpack.c.l.b16 %v115
  %v139 = vunpack.c.h.b16 %v115
  %v140 = vpack.c.b16 %v124, %v124
  %v141 = vpack.c.b16 %v125, %v125
  %v142 = vpack.c.b16 %v126, %v126
  %v143 = vpack.c.b16 %v127, %v127
  %v144 = vpack.c.b16 %v128, %v128
  %v145 = vpack.c.b16 %v129, %v129
  %v146 = vpack.c.b16 %v130, %v130
  %v147 = vpack.c.b16 %v131, %v131
  %v148 = vpack.c.b16 %v132, %v132
  %v149 = vpack.c.b16 %v133, %v133
  %v150 = vpack.c.b16 %v134, %v134
  %v151 = vpack.c.b16 %v135, %v135
  %v152 = vpack.c.b16 %v136, %v136
  %v153 = vpack.c.b16 %v137, %v137
  %v154 = vpack.c.b16 %v138, %v138
  %v155 = vpack.c.b16 %v139, %v139
  %172 = vst [vmem:[%s3] sm:$0xf] %v140
  %173 = vst [vmem:[%s3 + $0x4] sm:$0xf] %v141
  %174 = vst [vmem:[%s3 + $0x8] sm:$0xf] %v142
  %175 = vst [vmem:[%s3 + $0xc] sm:$0xf] %v143
  %176 = vst [vmem:[%s3 + $0x10] sm:$0xf] %v144
  %177 = vst [vmem:[%s3 + $0x14] sm:$0xf] %v145
  %178 = vst [vmem:[%s3 + $0x18] sm:$0xf] %v146
  %179 = vst [vmem:[%s3 + $0x1c] sm:$0xf] %v147
  %180 = vst [vmem:[%s3 + $0x20] sm:$0xf] %v148
  %181 = vst [vmem:[%s3 + $0x24] sm:$0xf] %v149
  %182 = vst [vmem:[%s3 + $0x28] sm:$0xf] %v150
  %183 = vst [vmem:[%s3 + $0x2c] sm:$0xf] %v151
  %184 = vst [vmem:[%s3 + $0x30] sm:$0xf] %v152
  %185 = vst [vmem:[%s3 + $0x34] sm:$0xf] %v153
  %186 = vst [vmem:[%s3 + $0x38] sm:$0xf] %v154
  %187 = vst [vmem:[%s3 + $0x3c] sm:$0xf] %v155
  // Predicated region
  $region14: #{_lambda_.3} parent=0 // pred_check
    _
  $region15: #{_lambda_.3} parent=0 // pred_check_branch
    %189 = sbr.rel (0) target = $region17
  $region16: #{_lambda_.3} parent=0 // pred_region
    _
  $region17: #{_lambda_.3} parent=0 // pred_fallthru
    _
  // Predicated region
  $region18: #{_lambda_.3} parent=0 // pred_check
    _
  $region19: #{_lambda_.3} parent=0 // pred_check_branch
    %191 = sbr.rel (0) target = $region21
  $region20: #{_lambda_.3} parent=0 // pred_region
    _
  $region21: #{_lambda_.3} parent=0 // pred_fallthru
    _

// kernel: _lambda_.2
$region0: #{_lambda_.2}
  #allocation0 [shape = 'u32[]', space=smem, size = 0x4, offset = 0x4, fixed_abs, tag = 'smem constant byte address 0x4 - core index']
  #allocation1 [shape = 'u32[144,128]{1,0:T(1,128)}', space=vmem, size = 0x12000, scoped, tag = 'internal scratch']
  %s0 = inlined_call_operand.vmem [shape: bf16[128,64], index: 0, kind: input, shape index: {}]
  %s1 = inlined_call_operand.vmem [shape: bf16[64,128], index: 1, kind: input, shape index: {}]
  %s2 = inlined_call_operand.vmem [shape: bf16[128,128], index: 2, kind: output, shape index: {0}]
  %s3 = inlined_call_operand.vmem [shape: f32[8,128], index: 3, kind: output, shape index: {1}]
  %s4 = inlined_call_operand.vmem [shape: f32[8,128], index: 4, kind: output, shape index: {2}]
  %5 = xla_tuple %s2, %s3, %s4
  %s6 = sld [smem:[#allocation0]]
  $region34: #{_lambda_.2} parent=0
    _
  %s8 = ssub.s32 1, %s6
  %s9 = scalar_select 0, %s8, %s6
  // Predicated region
  $region2: #{_lambda_.2} parent=0 // pred_check
    _
  $region3: #{_lambda_.2} parent=0 // pred_check_branch
    %11 = sbr.rel (0) target = $region5
  $region4: #{_lambda_.2} parent=0 // pred_region
    _
  $region5: #{_lambda_.2} parent=0 // pred_fallthru
    _
  // Predicated region
  $region6: #{_lambda_.2} parent=0 // pred_check
    _
  $region7: #{_lambda_.2} parent=0 // pred_check_branch
    %13 = sbr.rel (0) target = $region9
  $region8: #{_lambda_.2} parent=0 // pred_region
    _
  $region9: #{_lambda_.2} parent=0 // pred_fallthru
    _
  %v15 = vld [vmem:[%s0] sm:$0xf]
  %v16 = vld [vmem:[%s0 + $0x4] sm:$0xf]
  %v17 = vld [vmem:[%s0 + $0x8] sm:$0xf]
  %v18 = vld [vmem:[%s0 + $0xc] sm:$0xf]
  %v19 = vld [vmem:[%s0 + $0x10] sm:$0xf]
  %v20 = vld [vmem:[%s0 + $0x14] sm:$0xf]
  %v21 = vld [vmem:[%s0 + $0x18] sm:$0xf]
  %v22 = vld [vmem:[%s0 + $0x1c] sm:$0xf]
  %v23 = vld [vmem:[%s0 + $0x20] sm:$0xf]
  %v24 = vld [vmem:[%s0 + $0x24] sm:$0xf]
  %v25 = vld [vmem:[%s0 + $0x28] sm:$0xf]
  %v26 = vld [vmem:[%s0 + $0x2c] sm:$0xf]
  %v27 = vld [vmem:[%s0 + $0x30] sm:$0xf]
  %v28 = vld [vmem:[%s0 + $0x34] sm:$0xf]
  %v29 = vld [vmem:[%s0 + $0x38] sm:$0xf]
  %v30 = vld [vmem:[%s0 + $0x3c] sm:$0xf]
  %v31 = vld [vmem:[%s1] sm:$0xf]
  %v32 = vld [vmem:[%s1 + $0x4] sm:$0xf]
  %v33 = vld [vmem:[%s1 + $0x8] sm:$0xf]
  %v34 = vld [vmem:[%s1 + $0xc] sm:$0xf]
  %v35 = vld [vmem:[%s1 + $0x10] sm:$0xf]
  %v36 = vld [vmem:[%s1 + $0x14] sm:$0xf]
  %v37 = vld [vmem:[%s1 + $0x18] sm:$0xf]
  %v38 = vld [vmem:[%s1 + $0x1c] sm:$0xf]
  %v55 = vunpack.c.l.b16 %v15
  %v56 = vunpack.c.l.b16 %v16
  %v57 = vunpack.c.l.b16 %v17
  %v58 = vunpack.c.l.b16 %v18
  %v59 = vunpack.c.l.b16 %v19
  %v60 = vunpack.c.l.b16 %v20
  %v61 = vunpack.c.l.b16 %v21
  %v62 = vunpack.c.l.b16 %v22
  %v63 = vunpack.c.l.b16 %v23
  %v64 = vunpack.c.l.b16 %v24
  %v65 = vunpack.c.l.b16 %v25
  %v66 = vunpack.c.l.b16 %v26
  %v67 = vunpack.c.l.b16 %v27
  %v68 = vunpack.c.l.b16 %v28
  %v69 = vunpack.c.l.b16 %v29
  %v70 = vunpack.c.l.b16 %v30
  %v71 = vpack.c.b16 %v56, %v55
  %v72 = vpack.c.b16 %v58, %v57
  %v73 = vpack.c.b16 %v60, %v59
  %v74 = vpack.c.b16 %v62, %v61
  %v75 = vpack.c.b16 %v64, %v63
  %v76 = vpack.c.b16 %v66, %v65
  %v77 = vpack.c.b16 %v68, %v67
  %v78 = vpack.c.b16 %v70, %v69
  %v87 = vunpack.c.l.b16 %v31
  %v88 = vunpack.c.l.b16 %v32
  %v89 = vunpack.c.l.b16 %v33
  %v90 = vunpack.c.l.b16 %v34
  %v91 = vunpack.c.l.b16 %v35
  %v92 = vunpack.c.l.b16 %v36
  %v93 = vunpack.c.l.b16 %v37
  %v94 = vunpack.c.l.b16 %v38
  %v95 = vpack.c.b16 %v88, %v87
  %v96 = vpack.c.b16 %v90, %v89
  %v97 = vpack.c.b16 %v92, %v91
  %v98 = vpack.c.b16 %v94, %v93
  %vm103 = vcmask 523264
  %v105 = vsel %vm103, %v71, 0
  %v108 = vsel %vm103, %v72, 0
  %v111 = vsel %vm103, %v73, 0
  %v114 = vsel %vm103, %v74, 0
  %v117 = vsel %vm103, %v75, 0
  %v120 = vsel %vm103, %v76, 0
  %v123 = vsel %vm103, %v77, 0
  %v126 = vsel %vm103, %v78, 0
  %128 = vmatprep.subr.bf16.mxu0 0
  %129 = vmatpush1.bf16.msra.mxu0 %v95
  %130 = vmatprep.subr.bf16.mxu0 0
  %131 = vmatpush1.bf16.msra.mxu0 %v96
  %132 = vmatprep.subr.bf16.mxu0 0
  %133 = vmatpush1.bf16.msra.mxu0 %v97
  %134 = vmatprep.subr.bf16.mxu0 0
  %135 = vmatpush1.bf16.msra.mxu0 %v98
  %136 = vmatprep.subr.bf16.mxu0 0
  %137 = vmatpush1.bf16.msra.mxu0 0
  %138 = vmatprep.subr.bf16.mxu0 0
  %139 = vmatpush1.bf16.msra.mxu0 0
  %140 = vmatprep.subr.bf16.mxu0 0
  %141 = vmatpush1.bf16.msra.mxu0 0
  %142 = vmatprep.subr.bf16.mxu0 0
  %143 = vmatpush1.bf16.msra.mxu0 0
  %144 = vmatprep.subr.bf16.mxu0 0
  %145 = vmatpush1.bf16.msra.mxu0 0
  %146 = vmatprep.subr.bf16.mxu0 0
  %147 = vmatpush1.bf16.msra.mxu0 0
  %148 = vmatprep.subr.bf16.mxu0 0
  %149 = vmatpush1.bf16.msra.mxu0 0
  %150 = vmatprep.subr.bf16.mxu0 0
  %151 = vmatpush1.bf16.msra.mxu0 0
  %152 = vmatprep.subr.bf16.mxu0 0
  %153 = vmatpush1.bf16.msra.mxu0 0
  %154 = vmatprep.subr.bf16.mxu0 0
  %155 = vmatpush1.bf16.msra.mxu0 0
  %156 = vmatprep.subr.bf16.mxu0 0
  %157 = vmatpush1.bf16.msra.mxu0 0
  %158 = vmatprep.subr.bf16.mxu0 0
  %159 = vmatpush1.bf16.msra.mxu0 0
  %160 = vmatprep.mubr.bf16.mxu0 0
  %161 = vmatmul.mubr.bf16.gmra.mrb[0].mxu0 %v105
  %v162 = vpop.f32.mrb[0].mxu0
  %v163 = vadd.f32 0.0, %v162
  %v164 = vpop.f32.mrb[0].mxu0
  %v165 = vpop.f32.mrb[0].mxu0
  %v166 = vadd.f32 0.0, %v165
  %v167 = vpop.f32.mrb[0].mxu0
  %168 = vmatprep.mubr.bf16.mxu0 0
  %169 = vmatmul.mubr.bf16.gmra.mrb[0].mxu0 %v108
  %v170 = vpop.f32.mrb[0].mxu0
  %v171 = vadd.f32 0.0, %v170
  %v172 = vpop.f32.mrb[0].mxu0
  %v173 = vpop.f32.mrb[0].mxu0
  %v174 = vadd.f32 0.0, %v173
  %v175 = vpop.f32.mrb[0].mxu0
  %176 = vmatprep.mubr.bf16.mxu0 0
  %177 = vmatmul.mubr.bf16.gmra.mrb[0].mxu0 %v111
  %v178 = vpop.f32.mrb[0].mxu0
  %v179 = vadd.f32 0.0, %v178
  %v180 = vpop.f32.mrb[0].mxu0
  %v181 = vpop.f32.mrb[0].mxu0
  %v182 = vadd.f32 0.0, %v181
  %v183 = vpop.f32.mrb[0].mxu0
  %184 = vmatprep.mubr.bf16.mxu0 0
  %185 = vmatmul.mubr.bf16.gmra.mrb[0].mxu0 %v114
  %v186 = vpop.f32.mrb[0].mxu0
  %v187 = vadd.f32 0.0, %v186
  %v188 = vpop.f32.mrb[0].mxu0
  %v189 = vpop.f32.mrb[0].mxu0
  %v190 = vadd.f32 0.0, %v189
  %v191 = vpop.f32.mrb[0].mxu0
  %192 = vmatprep.mubr.bf16.mxu0 0
  %193 = vmatmul.mubr.bf16.gmra.mrb[0].mxu0 %v117
  %v194 = vpop.f32.mrb[0].mxu0
  %v195 = vadd.f32 0.0, %v194
  %v196 = vpop.f32.mrb[0].mxu0
  %v197 = vpop.f32.mrb[0].mxu0
  %v198 = vadd.f32 0.0, %v197
  %v199 = vpop.f32.mrb[0].mxu0
  %200 = vmatprep.mubr.bf16.mxu0 0
  %201 = vmatmul.mubr.bf16.gmra.mrb[0].mxu0 %v120
  %v202 = vpop.f32.mrb[0].mxu0
  %v203 = vadd.f32 0.0, %v202
  %v204 = vpop.f32.mrb[0].mxu0
  %v205 = vpop.f32.mrb[0].mxu0
  %v206 = vadd.f32 0.0, %v205
  %v207 = vpop.f32.mrb[0].mxu0
  %208 = vmatprep.mubr.bf16.mxu0 0
  %209 = vmatmul.mubr.bf16.gmra.mrb[0].mxu0 %v123
  %v210 = vpop.f32.mrb[0].mxu0
  %v211 = vadd.f32 0.0, %v210
  %v212 = vpop.f32.mrb[0].mxu0
  %v213 = vpop.f32.mrb[0].mxu0
  %v214 = vadd.f32 0.0, %v213
  %v215 = vpop.f32.mrb[0].mxu0
  %216 = vmatprep.mubr.bf16.mxu0 0
  %217 = vmatmul.mubr.bf16.gmra.mrb[0].mxu0 %v126
  %v218 = vpop.f32.mrb[0].mxu0
  %v219 = vadd.f32 0.0, %v218
  %v220 = vpop.f32.mrb[0].mxu0
  %v221 = vpop.f32.mrb[0].mxu0
  %v222 = vadd.f32 0.0, %v221
  %v223 = vpop.f32.mrb[0].mxu0
  %224 = vdwg.mxu0
  %v225 = vpack.c.bf16 %v166, %v163
  %v226 = vpack.c.bf16 %v174, %v171
  %v227 = vpack.c.bf16 %v182, %v179
  %v228 = vpack.c.bf16 %v190, %v187
  %v229 = vpack.c.bf16 %v198, %v195
  %v230 = vpack.c.bf16 %v206, %v203
  %v231 = vpack.c.bf16 %v214, %v211
  %v232 = vpack.c.bf16 %v222, %v219
  %v241 = vunpack.c.l.b16 %v225
  %v242 = vunpack.c.h.b16 %v225
  %v243 = vunpack.c.l.b16 %v226
  %v244 = vunpack.c.h.b16 %v226
  %v245 = vunpack.c.l.b16 %v227
  %v246 = vunpack.c.h.b16 %v227
  %v247 = vunpack.c.l.b16 %v228
  %v248 = vunpack.c.h.b16 %v228
  %v249 = vunpack.c.l.b16 %v229
  %v250 = vunpack.c.h.b16 %v229
  %v251 = vunpack.c.l.b16 %v230
  %v252 = vunpack.c.h.b16 %v230
  %v253 = vunpack.c.l.b16 %v231
  %v254 = vunpack.c.h.b16 %v231
  %v255 = vunpack.c.l.b16 %v232
  %v256 = vunpack.c.h.b16 %v232
  %v257 = vpack.c.b16 %v241, %v241
  %v258 = vpack.c.b16 %v242, %v242
  %v259 = vpack.c.b16 %v243, %v243
  %v260 = vpack.c.b16 %v244, %v244
  %v261 = vpack.c.b16 %v245, %v245
  %v262 = vpack.c.b16 %v246, %v246
  %v263 = vpack.c.b16 %v247, %v247
  %v264 = vpack.c.b16 %v248, %v248
  %v265 = vpack.c.b16 %v249, %v249
  %v266 = vpack.c.b16 %v250, %v250
  %v267 = vpack.c.b16 %v251, %v251
  %v268 = vpack.c.b16 %v252, %v252
  %v269 = vpack.c.b16 %v253, %v253
  %v270 = vpack.c.b16 %v254, %v254
  %v271 = vpack.c.b16 %v255, %v255
  %v272 = vpack.c.b16 %v256, %v256
  %289 = vst [vmem:[%s2] sm:$0xf] %v257
  %290 = vst [vmem:[%s2 + $0x4] sm:$0xf] %v258
  %291 = vst [vmem:[%s2 + $0x8] sm:$0xf] %v259
  %292 = vst [vmem:[%s2 + $0xc] sm:$0xf] %v260
  %293 = vst [vmem:[%s2 + $0x10] sm:$0xf] %v261
  %294 = vst [vmem:[%s2 + $0x14] sm:$0xf] %v262
  %295 = vst [vmem:[%s2 + $0x18] sm:$0xf] %v263
  %296 = vst [vmem:[%s2 + $0x1c] sm:$0xf] %v264
  %297 = vst [vmem:[%s2 + $0x20] sm:$0xf] %v265
  %298 = vst [vmem:[%s2 + $0x24] sm:$0xf] %v266
  %299 = vst [vmem:[%s2 + $0x28] sm:$0xf] %v267
  %300 = vst [vmem:[%s2 + $0x2c] sm:$0xf] %v268
  %301 = vst [vmem:[%s2 + $0x30] sm:$0xf] %v269
  %302 = vst [vmem:[%s2 + $0x34] sm:$0xf] %v270
  %303 = vst [vmem:[%s2 + $0x38] sm:$0xf] %v271
  %304 = vst [vmem:[%s2 + $0x3c] sm:$0xf] %v272
  %v305 = vadd.f32 %v163, %v166
  %v306 = vadd.f32 %v305, %v171
  %v307 = vadd.f32 %v306, %v174
  %v308 = vadd.f32 %v307, %v179
  %v309 = vadd.f32 %v308, %v182
  %v310 = vadd.f32 %v309, %v187
  %v311 = vadd.f32 %v310, %v190
  %v312 = vadd.f32 %v311, %v195
  %v313 = vadd.f32 %v312, %v198
  %v314 = vadd.f32 %v313, %v203
  %v315 = vadd.f32 %v314, %v206
  %v316 = vadd.f32 %v315, %v211
  %v317 = vadd.f32 %v316, %v214
  %v318 = vadd.f32 %v317, %v219
  %v319 = vadd.f32 %v318, %v222
  %320 = vst [vmem:[%s3] sm:$0xff] %v319
  %v321 = vmul.f32 %v163, %v163
  %v322 = vmul.f32 %v166, %v166
  %v323 = vmul.f32 %v171, %v171
  %v324 = vmul.f32 %v174, %v174
  %v325 = vmul.f32 %v179, %v179
  %v326 = vmul.f32 %v182, %v182
  %v327 = vmul.f32 %v187, %v187
  %v328 = vmul.f32 %v190, %v190
  %v329 = vmul.f32 %v195, %v195
  %v330 = vmul.f32 %v198, %v198
  %v331 = vmul.f32 %v203, %v203
  %v332 = vmul.f32 %v206, %v206
  %v333 = vmul.f32 %v211, %v211
  %v334 = vmul.f32 %v214, %v214
  %v335 = vmul.f32 %v219, %v219
  %v336 = vmul.f32 %v222, %v222
  %v337 = vadd.f32 %v321, %v322
  %v338 = vadd.f32 %v337, %v323
  %v339 = vadd.f32 %v338, %v324
  %v340 = vadd.f32 %v339, %v325
  %v341 = vadd.f32 %v340, %v326
  %v342 = vadd.f32 %v341, %v327
  %v343 = vadd.f32 %v342, %v328
  %v344 = vadd.f32 %v343, %v329
  %v345 = vadd.f32 %v344, %v330
  %v346 = vadd.f32 %v345, %v331
  %v347 = vadd.f32 %v346, %v332
  %v348 = vadd.f32 %v347, %v333
  %v349 = vadd.f32 %v348, %v334
  %v350 = vadd.f32 %v349, %v335
  %v351 = vadd.f32 %v350, %v336
  %352 = vst [vmem:[%s4] sm:$0xff] %v351
  // Predicated region
  $region10: #{_lambda_.2} parent=0 // pred_check
    _
  $region11: #{_lambda_.2} parent=0 // pred_check_branch
    %354 = sbr.rel (0) target = $region13
  $region12: #{_lambda_.2} parent=0 // pred_region
    _
  $region13: #{_lambda_.2} parent=0 // pred_fallthru
    _
  // Predicated region
  $region14: #{_lambda_.2} parent=0 // pred_check
    _
  $region15: #{_lambda_.2} parent=0 // pred_check_branch
    %356 = sbr.rel (0) target = $region17
  $region16: #{_lambda_.2} parent=0 // pred_region
    _
  $region17: #{_lambda_.2} parent=0 // pred_fallthru
    _
  // Predicated region
  $region18: #{_lambda_.2} parent=0 // pred_check
    _
  $region19: #{_lambda_.2} parent=0 // pred_check_branch
    %358 = sbr.rel (0) target = $region21
  $region20: #{_lambda_.2} parent=0 // pred_region
    _
  $region21: #{_lambda_.2} parent=0 // pred_fallthru
    _
  // Predicated region
  $region22: #{_lambda_.2} parent=0 // pred_check
    _
  $region23: #{_lambda_.2} parent=0 // pred_check_branch
    %360 = sbr.rel (0) target = $region25
  $region24: #{_lambda_.2} parent=0 // pred_region
    _
  $region25: #{_lambda_.2} parent=0 // pred_fallthru
    _
  // Predicated region
  $region26: #{_lambda_.2} parent=0 // pred_check
    _
  $region27: #{_lambda_.2} parent=0 // pred_check_branch
    %362 = sbr.rel (0) target = $region29
  $region28: #{_lambda_.2} parent=0 // pred_region
    _
  $region29: #{_lambda_.2} parent=0 // pred_fallthru
    _
  // Predicated region
  $region30: #{_lambda_.2} parent=0 // pred_check
    _
  $region31: #{_lambda_.2} parent=0 // pred_check_branch
    %364 = sbr.rel (0) target = $region33
  $region32: #{_lambda_.2} parent=0 // pred_region
    _
  $region33: #{_lambda_.2} parent=0 // pred_fallthru
    _

</llo_original>
